<compile_context>
chip_gen: v5e
topology: v5e:2x2
jax: 0.10.0
libtpu: 0.0.40
codegen_flags: <defaults>
</compile_context>

<pallas_src>
import functools

import jax
import jax.numpy as jnp
from jax.experimental import pallas as pl
from jax.experimental.pallas import tpu as pltpu


def _round_up(x, m):
    return (x + m - 1) // m * m


def _pick_tile(padded_dim, candidates):
    for t in candidates:
        if padded_dim % t == 0:
            return t
    return padded_dim


def _linear_kernel(x_ref, w_ref, b_ref, o_ref, acc_ref):
    # x_ref: (TM, TK), w_ref: (TK, TN), b_ref: (1, TN), o_ref: (TM, TN)
    k = pl.program_id(2)

    @pl.when(k == 0)
    def _():
        acc_ref[...] = jnp.zeros_like(acc_ref)

    acc_ref[...] += jnp.dot(
        x_ref[...], w_ref[...], preferred_element_type=jnp.float32
    )

    @pl.when(k == pl.num_programs(2) - 1)
    def _():
        o_ref[...] = (acc_ref[...] + b_ref[...]).astype(o_ref.dtype)


@functools.partial(jax.jit, static_argnames=("use_bf16",))
def linear_classifier(x, weight, bias, *, use_bf16=False):
    """y = x @ weight.T + bias, matching torch.nn.Linear.forward.

    x: [B, in_dim]; weight: [n_classes, in_dim] (PyTorch layout); bias: [n_classes].
    Returns [B, n_classes] in x.dtype.
    """
    B, in_dim = x.shape
    n_classes, in_dim_w = weight.shape
    assert in_dim == in_dim_w
    out_dtype = x.dtype

    # ---- tile selection (padded dims are multiples of the tiles) ----------
    TM = 256 if B >= 256 else _round_up(B, 8)
    Bp = _round_up(B, TM)

    Np = _round_up(n_classes, 128)
    TN = 256 if Np % 256 == 0 else 128

    Kp = _round_up(in_dim, 128)
    TK = _pick_tile(Kp, (512, 256, 128))

    # ---- layout prep: pad + pre-transpose weight to [K, N] ----------------
    compute_dtype = jnp.bfloat16 if use_bf16 else x.dtype
    xp = jnp.pad(x, ((0, Bp - B), (0, Kp - in_dim))).astype(compute_dtype)
    w_t = jnp.pad(weight, ((0, Np - n_classes), (0, Kp - in_dim))).T  # [Kp, Np]
    w_t = w_t.astype(compute_dtype)
    bias2d = jnp.pad(bias, (0, Np - n_classes)).astype(jnp.float32).reshape(1, Np)

    grid = (Bp // TM, Np // TN, Kp // TK)

    cost = pl.CostEstimate(
        flops=2 * Bp * Kp * Np,
        transcendentals=0,
        bytes_accessed=(
            xp.size * xp.dtype.itemsize
            + w_t.size * w_t.dtype.itemsize
            + Bp * Np * jnp.dtype(out_dtype).itemsize
        ),
    )

    out_padded = pl.pallas_call(
        _linear_kernel,
        out_shape=jax.ShapeDtypeStruct((Bp, Np), out_dtype),
        grid_spec=pltpu.PrefetchScalarGridSpec(
            num_scalar_prefetch=0,
            grid=grid,
            in_specs=[
                pl.BlockSpec((TM, TK), lambda i, j, k: (i, k)),   # x tile
                pl.BlockSpec((TK, TN), lambda i, j, k: (k, j)),   # w_t tile
                pl.BlockSpec((1, TN), lambda i, j, k: (0, j)),    # bias tile
            ],
            out_specs=pl.BlockSpec((TM, TN), lambda i, j, k: (i, j)),
            scratch_shapes=[pltpu.VMEM((TM, TN), jnp.float32)],
        ),
        compiler_params=pltpu.CompilerParams(
            dimension_semantics=("parallel", "parallel", "arbitrary"),
            vmem_limit_bytes=64 * 1024 * 1024,
        ),
        cost_estimate=cost,
    )(xp, w_t, bias2d)

    return out_padded[:B, :n_classes]


if __name__ == "__main__":
    key = jax.random.PRNGKey(0)
    kx, kw, kb = jax.random.split(key, 3)

    B, in_dim, n_classes = 8, 32, 16

    x = jax.random.normal(kx, (B, in_dim), dtype=jnp.float32)
    # Deterministic init mimicking nn.Linear's uniform(-1/sqrt(in_dim), 1/sqrt(in_dim))
    bound = 1.0 / (in_dim ** 0.5)
    weight = jax.random.uniform(kw, (n_classes, in_dim), dtype=jnp.float32,
                                minval=-bound, maxval=bound)
    bias = jax.random.uniform(kb, (n_classes,), dtype=jnp.float32,
                              minval=-bound, maxval=bound)

    y = linear_classifier(x, weight, bias)
    y = jax.block_until_ready(y)

    # Reference check against plain JAX
    y_ref = x @ weight.T + bias
    assert y.shape == (B, n_classes)
    assert jnp.allclose(y, y_ref, atol=1e-5, rtol=1e-5)

    print("KERNEL_OK")
</pallas_src>

<mosaic_0001>
module attributes {stable_mosaic.version = 11 : i64} {
  func.func @_linear_kernel(%arg0: i32, %arg1: i32, %arg2: i32, %arg3: memref<8x128xf32, #tpu.memory_space<vmem>>, %arg4: memref<128x128xf32, #tpu.memory_space<vmem>>, %arg5: memref<1x128xf32, #tpu.memory_space<vmem>>, %arg6: memref<8x128xf32, #tpu.memory_space<vmem>>, %arg7: memref<8x128xf32, #tpu.memory_space<vmem>>) attributes {dimension_semantics = [#tpu.dimension_semantics<parallel>, #tpu.dimension_semantics<parallel>, #tpu.dimension_semantics<arbitrary>], iteration_bounds = array<i64: 1, 1, 1>, scalar_prefetch = 0 : i64, scratch_operands = 1 : i64, tpu.core_type = #tpu.core_type<tc>, window_params = [{transform_indices = @transform_0, window_bounds = array<i64: 8, 128>}, {transform_indices = @transform_1, window_bounds = array<i64: 128, 128>}, {transform_indices = @transform_2, window_bounds = array<i64: 1, 128>}, {transform_indices = @transform_3, window_bounds = array<i64: 8, 128>}]} {
    %c0_i32 = arith.constant 0 : i32
    %0 = arith.cmpi eq, %arg2, %c0_i32 : i32
    %1 = arith.extui %0 : i1 to i32
    %c0_i32_0 = arith.constant 0 : i32
    %2 = arith.cmpi ne, %1, %c0_i32_0 : i32
    scf.if %2 {
      %cst_10 = arith.constant 0.000000e+00 : f32
      %12 = vector.broadcast %cst_10 : f32 to vector<8x128xf32>
      %c0_11 = arith.constant 0 : index
      %c0_12 = arith.constant 0 : index
      %13 = vector.load %arg7[%c0_11, %c0_12] : memref<8x128xf32, #tpu.memory_space<vmem>>, vector<8x128xf32>
      tpu.vector_store %arg7[%c0_11, %c0_12], %12 {strides = array<i32>} : memref<8x128xf32, #tpu.memory_space<vmem>>, vector<8x128xf32>,
    } else {
    }
    %c0 = arith.constant 0 : index
    %c0_1 = arith.constant 0 : index
    %3 = vector.load %arg7[%c0, %c0_1] : memref<8x128xf32, #tpu.memory_space<vmem>>, vector<8x128xf32>
    %c0_2 = arith.constant 0 : index
    %c0_3 = arith.constant 0 : index
    %4 = vector.load %arg3[%c0_2, %c0_3] : memref<8x128xf32, #tpu.memory_space<vmem>>, vector<8x128xf32>
    %c0_4 = arith.constant 0 : index
    %c0_5 = arith.constant 0 : index
    %5 = vector.load %arg4[%c0_4, %c0_5] : memref<128x128xf32, #tpu.memory_space<vmem>>, vector<128x128xf32>
    %cst = arith.constant dense<0.000000e+00> : vector<8x128xf32>
    %6 = tpu.matmul %4, %5, %cst {dimension_numbers = #tpu.dot_dimension_numbers<[1], [0], [0], [1], [0, 0, 1, 1], [], []>} : vector<8x128xf32>, vector<128x128xf32>, vector<8x128xf32> -> vector<8x128xf32>
    %7 = arith.addf %3, %6 : vector<8x128xf32>
    %c0_6 = arith.constant 0 : index
    %c0_7 = arith.constant 0 : index
    %8 = vector.load %arg7[%c0_6, %c0_7] : memref<8x128xf32, #tpu.memory_space<vmem>>, vector<8x128xf32>
    tpu.vector_store %arg7[%c0_6, %c0_7], %7 {strides = array<i32>} : memref<8x128xf32, #tpu.memory_space<vmem>>, vector<8x128xf32>,
    %c0_i32_8 = arith.constant 0 : i32
    %9 = arith.cmpi eq, %arg2, %c0_i32_8 : i32
    %10 = arith.extui %9 : i1 to i32
    %c0_i32_9 = arith.constant 0 : i32
    %11 = arith.cmpi ne, %10, %c0_i32_9 : i32
    scf.if %11 {
      %c0_10 = arith.constant 0 : index
      %c0_11 = arith.constant 0 : index
      %12 = vector.load %arg7[%c0_10, %c0_11] : memref<8x128xf32, #tpu.memory_space<vmem>>, vector<8x128xf32>
      %c0_12 = arith.constant 0 : index
      %c0_13 = arith.constant 0 : index
      %13 = vector.load %arg5[%c0_12, %c0_13] : memref<1x128xf32, #tpu.memory_space<vmem>>, vector<1x128xf32>
      %14 = vector.broadcast %13 : vector<1x128xf32> to vector<8x128xf32>
      %15 = arith.addf %12, %14 : vector<8x128xf32>
      %c0_14 = arith.constant 0 : index
      %c0_15 = arith.constant 0 : index
      %16 = vector.load %arg6[%c0_14, %c0_15] : memref<8x128xf32, #tpu.memory_space<vmem>>, vector<8x128xf32>
      tpu.vector_store %arg6[%c0_14, %c0_15], %15 {strides = array<i32>} : memref<8x128xf32, #tpu.memory_space<vmem>>, vector<8x128xf32>,
    } else {
    }
    return
  }
  func.func @transform_0(%arg0: i32, %arg1: i32, %arg2: i32) -> (i32, i32) {
    %c0_i32 = arith.constant 0 : i32
    return %arg0, %arg2 : i32, i32
  }
  func.func @transform_1(%arg0: i32, %arg1: i32, %arg2: i32) -> (i32, i32) {
    %c0_i32 = arith.constant 0 : i32
    return %arg2, %arg1 : i32, i32
  }
  func.func @transform_2(%arg0: i32, %arg1: i32, %arg2: i32) -> (i32, i32) {
    %c0_i32 = arith.constant 0 : i32
    %c0_i32_0 = arith.constant 0 : i32
    return %c0_i32, %arg1 : i32, i32
  }
  func.func @transform_3(%arg0: i32, %arg1: i32, %arg2: i32) -> (i32, i32) {
    %c0_i32 = arith.constant 0 : i32
    return %arg0, %arg1 : i32, i32
  }
}

</mosaic_0001>

<llo_original>
// kernel: linear_classifier.1
$region0: #{linear_classifier.1}
  #allocation0 [shape = 'u32[]', space=smem, size = 0x4, offset = 0x4, fixed_abs, tag = 'smem constant byte address 0x4 - core index']
  #allocation1 [shape = 'u32[72,128]{1,0:T(1,128)}', space=vmem, size = 0x9000, scoped, tag = 'internal scratch']
  #allocation2 [shape = 'f32[8,128]{1,0:T(8,128)}', space=vmem, size = 0x1000, scoped, tag = 'scratch operand']
  %s0 = inlined_call_operand.vmem [shape: f32[8,128], index: 0, kind: input, shape index: {}]
  %s1 = inlined_call_operand.vmem [shape: f32[128,128], index: 1, kind: input, shape index: {}]
  %s2 = inlined_call_operand.vmem [shape: f32[1,128], index: 2, kind: input, shape index: {}]
  %s3 = inlined_call_operand.hbm [shape: f32[8,128], index: 3, kind: output, shape index: {}]
  %s4 = sld [smem:[#allocation0]]
  $region30: #{linear_classifier.1} parent=0
    _
  %s6 = ssub.s32 1, %s4
  %s7 = scalar_select 0, %s6, %s4
  $region1: #{linear_classifier.1} parent=0
    #allocation3 [shape = 'u8[4096]{0}', space=vmem, size = 0x1000, scoped, tag = 'output window, operand 0, single buffered']
    #allocation4 [shape = 's32[1]{0}', space=sflag, size = 0x4, scoped, tag = 'scoped memory for linear_classifier.1']
    %8 = vsyncpa [#allocation4], 0
    // Predicated region
    $region2: #{linear_classifier.1} parent=1 // pred_check
      _
    $region3: #{linear_classifier.1} parent=1 // pred_check_branch
      %10 = sbr.rel (0) target = $region5
    $region4: #{linear_classifier.1} parent=1 // pred_region
      _
    $region5: #{linear_classifier.1} parent=1 // pred_fallthru
      _
    // Predicated region
    $region6: #{linear_classifier.1} parent=1 // pred_check
      _
    $region7: #{linear_classifier.1} parent=1 // pred_check_branch
      %12 = sbr.rel (0) target = $region9
    $region8: #{linear_classifier.1} parent=1 // pred_region
      _
    $region9: #{linear_classifier.1} parent=1 // pred_fallthru
      _
    // Predicated region
    $region10: #{linear_classifier.1} parent=1 // pred_check
      _
    $region11: #{linear_classifier.1} parent=1 // pred_check_branch
      %14 = sbr.rel (0) target = $region13
    $region12: #{linear_classifier.1} parent=1 // pred_region
      _
    $region13: #{linear_classifier.1} parent=1 // pred_fallthru
      _
    %p15 = scmp.eq.s32.totalorder 0, 0
    // Predicated region
    $region14: #{linear_classifier.1} parent=1 // pred_check
      %p16 = pneg %p15
    $region15: #{linear_classifier.1} parent=1 // pred_check_branch
      %18 = sbr.rel (%p16) target = $region17
    $region16: #{linear_classifier.1} parent=1 // pred_region
      %19 = vst [vmem:[#allocation2] sm:$0xff] 0.0
    $region17: #{linear_classifier.1} parent=1 // pred_fallthru
      _
    %v20 = vld [vmem:[#allocation2] sm:$0xff]
    %v21 = vld [vmem:[%s0] sm:$0xff]
    %v22 = vld [vmem:[%s1] sm:$0xff]
    %v23 = vld [vmem:[%s1 + $0x8] sm:$0xff]
    %v24 = vld [vmem:[%s1 + $0x10] sm:$0xff]
    %v25 = vld [vmem:[%s1 + $0x18] sm:$0xff]
    %v26 = vld [vmem:[%s1 + $0x20] sm:$0xff]
    %v27 = vld [vmem:[%s1 + $0x28] sm:$0xff]
    %v28 = vld [vmem:[%s1 + $0x30] sm:$0xff]
    %v29 = vld [vmem:[%s1 + $0x38] sm:$0xff]
    %v30 = vld [vmem:[%s1 + $0x40] sm:$0xff]
    %v31 = vld [vmem:[%s1 + $0x48] sm:$0xff]
    %v32 = vld [vmem:[%s1 + $0x50] sm:$0xff]
    %v33 = vld [vmem:[%s1 + $0x58] sm:$0xff]
    %v34 = vld [vmem:[%s1 + $0x60] sm:$0xff]
    %v35 = vld [vmem:[%s1 + $0x68] sm:$0xff]
    %v36 = vld [vmem:[%s1 + $0x70] sm:$0xff]
    %v37 = vld [vmem:[%s1 + $0x78] sm:$0xff]
    %38 = vmatpush.msra.mxu0 %v37
    %39 = vmatpush.msra.mxu0 %v36
    %40 = vmatpush.msra.mxu0 %v35
    %41 = vmatpush.msra.mxu0 %v34
    %42 = vmatpush.msra.mxu0 %v33
    %43 = vmatpush.msra.mxu0 %v32
    %44 = vmatpush.msra.mxu0 %v31
    %45 = vmatpush.msra.mxu0 %v30
    %46 = vmatpush.msra.mxu0 %v29
    %47 = vmatpush.msra.mxu0 %v28
    %48 = vmatpush.msra.mxu0 %v27
    %49 = vmatpush.msra.mxu0 %v26
    %50 = vmatpush.msra.mxu0 %v25
    %51 = vmatpush.msra.mxu0 %v24
    %52 = vmatpush.msra.mxu0 %v23
    %53 = vmatpush.msra.mxu0 %v22
    %54 = vmatmul.f32.gmra.mxu0 %v21
    %v55 = vpop.f32.mrf.mxu0
    %v56 = vadd.f32 0.0, %v55
    %57 = vdwg.mxu0
    %v58 = vadd.f32 %v20, %v56
    %59 = vst [vmem:[#allocation2] sm:$0xff] %v58
    // Predicated region
    $region18: #{linear_classifier.1} parent=1 // pred_check
      %p60 = pneg %p15
    $region19: #{linear_classifier.1} parent=1 // pred_check_branch
      %62 = sbr.rel (%p60) target = $region21
    $region20: #{linear_classifier.1} parent=1 // pred_region
      %v63 = vld [vmem:[#allocation2] sm:$0xff]
      %v64 = vld [vmem:[%s2] sm:$0x1]
      %v66 = vperm.slane %v64, 0
      %v68 = vadd.f32 %v63, %v66
      %69 = vst [vmem:[#allocation3] sm:$0xff] %v68
    $region21: #{linear_classifier.1} parent=1 // pred_fallthru
      _
    // Predicated region
    $region22: #{linear_classifier.1} parent=1 // pred_check
      _
    $region23: #{linear_classifier.1} parent=1 // pred_check_branch
      %71 = sbr.rel (0) target = $region25
    $region24: #{linear_classifier.1} parent=1 // pred_region
      %73 = vsyncadd [#allocation4], 0
      %s75 = sshll.u32 [#allocation3], 4
      %s76 = int_to_ptr.vmem [resolvable:$true] %s75
      %s77 = sshll.u32 %s3, 4
      %s78 = int_to_ptr.hbm [resolvable:$true] %s77
      %80 = dma.vmem_to_hbm [thread:$0]  %s76, 128, %s78, [#allocation4]
    $region25: #{linear_classifier.1} parent=1 // pred_fallthru
      _
    // Predicated region
    $region26: #{linear_classifier.1} parent=1 // pred_check
      _
    $region27: #{linear_classifier.1} parent=1 // pred_check_branch
      %82 = sbr.rel (0) target = $region29
    $region28: #{linear_classifier.1} parent=1 // pred_region
      %84 = dma.done [#allocation4], 128
    $region29: #{linear_classifier.1} parent=1 // pred_fallthru
      _
    %85 = vsyncpa [#allocation4], 1

</llo_original>
